<compile_context>
chip_gen: v7x
topology: tpu7x:2x2x1
jax: 0.10.0
libtpu: 0.0.40
codegen_flags: <defaults>
</compile_context>

<pallas_src>
import functools
import math

import jax
import jax.numpy as jnp
from jax import lax
from jax.experimental import pallas as pl
from jax.experimental.pallas import tpu as pltpu

_NEG_BIG = -1e30  # finite "-inf" for masked max / masked exp


def _round_up(x, m):
    return (x + m - 1) // m * m


def _dib_kernel(y_pred_ref, labels_ref, z_ref, w_ref, nuis_ref, out_ref,
                *, n_heads, n_classes, batch, tile_b):
    f32 = jnp.float32
    i = pl.program_id(0)

    # rows beyond the true batch are padding -> masked out of both sums
    row = lax.broadcasted_iota(jnp.int32, (tile_b, 1), 0) + i * tile_b
    valid = row < batch

    # ---- sufficiency: sum_rows CE(y_pred, labels); lane padding is -1e30 -> inert ----
    yp = y_pred_ref[...].astype(f32)                           # (tile_b, C_pad)
    lab = labels_ref[...]                                      # (tile_b, 1) int32
    c_pad = yp.shape[-1]
    cls = lax.broadcasted_iota(jnp.int32, (tile_b, c_pad), 1)  # lane id = class id
    m = jnp.max(yp, axis=-1, keepdims=True)
    lse = jnp.log(jnp.sum(jnp.exp(yp - m), axis=-1, keepdims=True)) + m
    picked = jnp.sum(jnp.where(cls == lab, yp, 0.0), axis=-1, keepdims=True)
    suf_sum = jnp.sum(jnp.where(valid, lse - picked, 0.0),
                      axis=0, keepdims=True)                   # (1, 1) raw sum

    # ---- minimality: sum_{rows,heads} CE(head_h([z, y]), N_h) ----
    # all H heads in ONE MXU push (bias folded via the ones column); f32 accumulate
    logits = jnp.dot(z_ref[...], w_ref[...],
                     preferred_element_type=f32)               # (tile_b, HC_pad)
    hc = n_heads * n_classes
    hc_pad = logits.shape[-1]
    lane = lax.broadcasted_iota(jnp.int32, (tile_b, hc_pad), 1)
    nuis = nuis_ref[...]                                       # (tile_b, H) int32

    # pass 1 (VPU/XLU only): per-head max broadcast into that head's lane segment,
    # running sum of maxes, and one combined picked-lane mask for all heads
    m_bcast = jnp.zeros((tile_b, hc_pad), f32)
    m_sum = jnp.zeros((tile_b, 1), f32)
    pick = lane < 0                                            # all-false mask
    for h in range(n_heads):                                   # static unroll, H small
        lo = h * n_classes
        in_h = (lane >= lo) & (lane < lo + n_classes)
        m_h = jnp.max(jnp.where(in_h, logits, _NEG_BIG), axis=-1, keepdims=True)
        m_bcast = jnp.where(in_h, m_h, m_bcast)
        m_sum = m_sum + m_h
        pick = pick | (lane == (nuis[:, h:h + 1] + lo))

    # single exp pass over the whole slab; mask BEFORE exp so nothing overflows
    e_all = jnp.exp(jnp.where(lane < hc, logits - m_bcast, _NEG_BIG))

    # pass 2: per-head segment sums -> log; one combined picked-logit lane sum
    ls_sum = jnp.zeros((tile_b, 1), f32)
    for h in range(n_heads):
        lo = h * n_classes
        in_h = (lane >= lo) & (lane < lo + n_classes)
        ls_sum = ls_sum + jnp.log(jnp.sum(jnp.where(in_h, e_all, 0.0),
                                          axis=-1, keepdims=True))
    p_sum = jnp.sum(jnp.where(pick, logits, 0.0), axis=-1, keepdims=True)
    min_sum = jnp.sum(jnp.where(valid, ls_sum + m_sum - p_sum, 0.0),
                      axis=0, keepdims=True)                   # (1, 1) raw sum

    # pack the two raw partial sums into one lane-dense block -> single writeback
    out_lane = lax.broadcasted_iota(jnp.int32, (1, 128), 1)
    rowv = jnp.where(out_lane == 0, suf_sum,
           jnp.where(out_lane == 1, min_sum, 0.0))             # (1, 128)
    out_ref[...] = rowv.reshape(1, 1, 128)


def prepare_minimality_heads(W_heads, b_heads):
    """Fuse all H minimality heads + biases into one lane-padded (D+2, HC_pad) matrix.

    Call ONCE at parameter init/update time, not per training step (removes the
    concat+transpose+reshape XLA chain from the per-step path)."""
    n_heads, inp_dim, n_classes = W_heads.shape                # inp_dim = z_dim + 1 ("Z,Y")
    hc = n_heads * n_classes
    d2 = inp_dim + 1                                           # + ones column (bias)
    d2_pad = _round_up(d2, 8)                                  # f32 sublane tiling
    hc_pad = _round_up(hc, 128)                                # lane-dense matmul N
    w_aug = jnp.concatenate(
        [W_heads, b_heads[:, None, :].astype(W_heads.dtype)], axis=1)   # (H, D+2, C)
    w_flat = jnp.transpose(w_aug, (1, 0, 2)).reshape(d2, hc)            # (D+2, H*C)
    return jnp.zeros((d2_pad, hc_pad), W_heads.dtype).at[:d2, :hc].set(w_flat)


def dib_loss_forward(y_pred, z_sample, labels, x_idcs, nuisances, w_flat_pad,
                     *, beta=1.0, n_classes=10):
    """Forward value of DIBLoss with V := Linear(z_dim+1, n_classes), inp_min='Z,Y'."""
    B, C = y_pred.shape
    n_heads = nuisances.shape[0]
    z = z_sample[0]                                            # (B, z_dim)
    z_dim = z.shape[-1]
    d2 = z_dim + 2
    d2_pad, hc_pad = w_flat_pad.shape
    assert d2_pad == _round_up(d2, 8) and hc_pad >= n_heads * n_classes

    # Batch tiling: big tiles amortize per-step overhead and fill the MXU rows, capped
    # so double-buffered tiles + the (tile_b, HC_pad) f32 logits fit v7x's 64 MiB VMEM.
    tile_b = min(256, _round_up(B, 8))
    b_pad = _round_up(B, tile_b)
    n_tiles = b_pad // tile_b
    c_pad = _round_up(C, 128)

    # glue (lane/sublane padding only; no f32 one-hots, no dtype casts)
    yp_pad = jnp.full((b_pad, c_pad), _NEG_BIG, y_pred.dtype).at[:B, :C].set(y_pred)
    labels_i32 = jnp.zeros((b_pad, 1), jnp.int32).at[:B, 0].set(labels.astype(jnp.int32))
    z_pad = (jnp.zeros((b_pad, d2_pad), z.dtype)
             .at[:B, :z_dim].set(z)
             .at[:B, z_dim].set(labels.astype(z.dtype))
             .at[:B, z_dim + 1].set(1))
    nuis_i32 = jnp.zeros((b_pad, n_heads), jnp.int32).at[:B, :].set(
        nuisances[:, x_idcs].T.astype(jnp.int32))

    kernel = functools.partial(_dib_kernel, n_heads=n_heads, n_classes=n_classes,
                               batch=B, tile_b=tile_b)

    cost = pl.CostEstimate(
        flops=int(2 * b_pad * d2_pad * hc_pad + 12 * b_pad * (c_pad + hc_pad)),
        transcendentals=int(b_pad * (c_pad + hc_pad) + b_pad * (1 + n_heads)),
        bytes_accessed=int(yp_pad.size * yp_pad.dtype.itemsize
                           + z_pad.size * z_pad.dtype.itemsize
                           + w_flat_pad.size * w_flat_pad.dtype.itemsize
                           + labels_i32.size * 4 + nuis_i32.size * 4
                           + n_tiles * 128 * 4))

    partials = pl.pallas_call(
        kernel,
        out_shape=jax.ShapeDtypeStruct((n_tiles, 1, 128), jnp.float32),
        grid=(n_tiles,),
        in_specs=[
            pl.BlockSpec((tile_b, c_pad), lambda i: (i, 0)),
            pl.BlockSpec((tile_b, 1), lambda i: (i, 0)),
            pl.BlockSpec((tile_b, d2_pad), lambda i: (i, 0)),
            pl.BlockSpec((d2_pad, hc_pad), lambda i: (0, 0)),   # heads stay VMEM-resident
            pl.BlockSpec((tile_b, n_heads), lambda i: (i, 0)),
        ],
        out_specs=pl.BlockSpec((1, 1, 128), lambda i: (i, 0, 0)),
        compiler_params=pltpu.CompilerParams(
            dimension_semantics=("parallel",),                  # independent per-tile partials
            vmem_limit_bytes=32 * 1024 * 1024),
        cost_estimate=cost,
    )(yp_pad, labels_i32, z_pad, w_flat_pad, nuis_i32)

    # tiny final combine/normalize in XLA (keeps the grid axis parallel on v7x)
    h_suf = jnp.sum(partials[:, 0, 0]) / B
    h_min = jnp.sum(partials[:, 0, 1]) / (B * n_heads)
    dib = h_suf - beta * h_min
    return dib, h_suf, h_min


def _reference(y_pred, z_sample, labels, x_idcs, nuisances, W_heads, b_heads,
               beta, n_classes):
    def ce(logits, tgt):
        logp = jax.nn.log_softmax(logits, axis=-1)
        return -jnp.mean(jnp.take_along_axis(logp, tgt[:, None], axis=-1))
    h_suf = ce(y_pred, labels)
    z_cat = jnp.concatenate([z_sample[0], labels.astype(jnp.float32)[:, None]], -1)
    h_min = 0.0
    for h in range(W_heads.shape[0]):
        logits = z_cat @ W_heads[h] + b_heads[h]
        h_min = h_min + ce(logits, nuisances[h, x_idcs])
    h_min = h_min / W_heads.shape[0]
    return h_suf - beta * h_min


if __name__ == "__main__":
    key = jax.random.PRNGKey(0)
    k1, k2, k3, k4, k5, k6 = jax.random.split(key, 6)

    B, C, Z, H, N_TRAIN = 8, 10, 32, 5, 64     # batch, n_classes, z_dim, n_heads, n_train
    beta = 1.0

    # forward inputs (out = (y_pred, z_sample), targets = (labels, x_idcs))
    y_pred = jax.random.normal(k1, (B, C), jnp.float32)
    z_sample = jax.random.normal(k2, (1, B, Z), jnp.float32)
    labels = jax.random.randint(k3, (B,), 0, C)
    x_idcs = jax.random.randint(k4, (B,), 0, N_TRAIN)

    # deterministic synthetic parameters
    nuisances = jax.random.randint(k5, (H, N_TRAIN), 0, C)     # NaiveNuisanceGetter table
    W_heads = 0.05 * jax.random.normal(k6, (H, Z + 1, C), jnp.float32)
    b_heads = jnp.zeros((H, C), jnp.float32)

    # fuse/pad the minimality heads once, outside the per-step path
    w_flat_pad = prepare_minimality_heads(W_heads, b_heads)

    fwd = jax.jit(functools.partial(dib_loss_forward, beta=beta, n_classes=C))
    dib, h_suf, h_min = fwd(y_pred, z_sample, labels, x_idcs, nuisances, w_flat_pad)
    jax.block_until_ready(dib)

    ref = _reference(y_pred, z_sample, labels, x_idcs, nuisances, W_heads,
                     b_heads, beta, C)
    assert jnp.allclose(dib, ref, atol=1e-3, rtol=1e-3), (dib, ref)
    assert math.isfinite(float(h_suf)) and math.isfinite(float(h_min))

    print("KERNEL_OK")
</pallas_src>

<mosaic_0001>
module attributes {stable_mosaic.version = 11 : i64} {
  func.func @_dib_kernel(%arg0: i32, %arg1: memref<8x128xf32, #tpu.memory_space<vmem>>, %arg2: memref<8x1xi32, #tpu.memory_space<vmem>>, %arg3: memref<8x40xf32, #tpu.memory_space<vmem>>, %arg4: memref<40x128xf32, #tpu.memory_space<vmem>>, %arg5: memref<8x5xi32, #tpu.memory_space<vmem>>, %arg6: memref<1x1x128xf32, #tpu.memory_space<vmem>>) attributes {dimension_semantics = [#tpu.dimension_semantics<parallel>], iteration_bounds = array<i64: 1>, scalar_prefetch = 0 : i64, scratch_operands = 0 : i64, tpu.core_type = #tpu.core_type<tc>, window_params = [{transform_indices = @transform_0, window_bounds = array<i64: 8, 128>}, {transform_indices = @transform_1, window_bounds = array<i64: 8, 1>}, {transform_indices = @transform_2, window_bounds = array<i64: 8, 40>}, {pipeline_mode = #tpu.pipeline_mode<synchronous>, transform_indices = @transform_3, window_bounds = array<i64: 40, 128>}, {transform_indices = @transform_4, window_bounds = array<i64: 8, 5>}, {transform_indices = @transform_5, window_bounds = array<i64: 1, 1, 128>}]} {
    %0 = tpu.iota {dimensions = array<i32: 0>} : vector<8x1xi32>
    %c8_i32 = arith.constant 8 : i32
    %1 = arith.muli %arg0, %c8_i32 : i32
    %2 = vector.broadcast %1 : i32 to vector<8x1xi32>
    %3 = arith.addi %0, %2 : vector<8x1xi32>
    %c8_i32_0 = arith.constant 8 : i32
    %4 = vector.broadcast %c8_i32_0 : i32 to vector<8x1xi32>
    %5 = arith.cmpi slt, %3, %4 : vector<8x1xi32>
    %c0 = arith.constant 0 : index
    %c0_1 = arith.constant 0 : index
    %6 = vector.load %arg1[%c0, %c0_1] : memref<8x128xf32, #tpu.memory_space<vmem>>, vector<8x128xf32>
    %c0_2 = arith.constant 0 : index
    %c0_3 = arith.constant 0 : index
    %7 = vector.load %arg2[%c0_2, %c0_3] : memref<8x1xi32, #tpu.memory_space<vmem>>, vector<8x1xi32>
    %8 = tpu.iota {dimensions = array<i32: 1>} : vector<8x128xi32>
    %cst = arith.constant dense<0xFF800000> : vector<8xf32>
    %9 = vector.multi_reduction <maximumf>, %6, %cst [1] : vector<8x128xf32> to vector<8xf32>
    %10 = vector.shape_cast %9 : vector<8xf32> to vector<8x1xf32>
    %11 = vector.broadcast %10 : vector<8x1xf32> to vector<8x128xf32>
    %12 = arith.subf %6, %11 : vector<8x128xf32>
    %13 = math.exp %12 : vector<8x128xf32>
    %cst_4 = arith.constant dense<0.000000e+00> : vector<8xf32>
    %14 = vector.multi_reduction <add>, %13, %cst_4 [1] : vector<8x128xf32> to vector<8xf32>
    %15 = vector.shape_cast %14 : vector<8xf32> to vector<8x1xf32>
    %16 = math.log %15 : vector<8x1xf32>
    %17 = arith.addf %16, %10 : vector<8x1xf32>
    %18 = vector.broadcast %7 : vector<8x1xi32> to vector<8x128xi32>
    %19 = arith.cmpi eq, %8, %18 : vector<8x128xi32>
    %cst_5 = arith.constant 0.000000e+00 : f32
    %20 = vector.broadcast %cst_5 : f32 to vector<8x128xf32>
    %21 = arith.select %19, %6, %20 : vector<8x128xi1>, vector<8x128xf32>
    %cst_6 = arith.constant dense<0.000000e+00> : vector<8xf32>
    %22 = vector.multi_reduction <add>, %21, %cst_6 [1] : vector<8x128xf32> to vector<8xf32>
    %23 = vector.shape_cast %22 : vector<8xf32> to vector<8x1xf32>
    %24 = arith.subf %17, %23 : vector<8x1xf32>
    %cst_7 = arith.constant 0.000000e+00 : f32
    %25 = vector.broadcast %cst_7 : f32 to vector<8x1xf32>
    %26 = arith.select %5, %24, %25 : vector<8x1xi1>, vector<8x1xf32>
    %cst_8 = arith.constant dense<0.000000e+00> : vector<1xf32>
    %27 = vector.multi_reduction <add>, %26, %cst_8 [0] : vector<8x1xf32> to vector<1xf32>
    %28 = vector.shape_cast %27 : vector<1xf32> to vector<1x1xf32>
    %c0_9 = arith.constant 0 : index
    %c0_10 = arith.constant 0 : index
    %29 = vector.load %arg3[%c0_9, %c0_10] : memref<8x40xf32, #tpu.memory_space<vmem>>, vector<8x40xf32>
    %c0_11 = arith.constant 0 : index
    %c0_12 = arith.constant 0 : index
    %30 = vector.load %arg4[%c0_11, %c0_12] : memref<40x128xf32, #tpu.memory_space<vmem>>, vector<40x128xf32>
    %cst_13 = arith.constant dense<0.000000e+00> : vector<8x128xf32>
    %31 = tpu.matmul %29, %30, %cst_13 {dimension_numbers = #tpu.dot_dimension_numbers<[1], [0], [0], [1], [0, 0, 1, 1], [], []>} : vector<8x40xf32>, vector<40x128xf32>, vector<8x128xf32> -> vector<8x128xf32>
    %32 = tpu.iota {dimensions = array<i32: 1>} : vector<8x128xi32>
    %c0_14 = arith.constant 0 : index
    %c0_15 = arith.constant 0 : index
    %33 = vector.load %arg5[%c0_14, %c0_15] : memref<8x5xi32, #tpu.memory_space<vmem>>, vector<8x5xi32>
    %cst_16 = arith.constant 0.000000e+00 : f32
    %34 = vector.broadcast %cst_16 : f32 to vector<8x128xf32>
    %cst_17 = arith.constant 0.000000e+00 : f32
    %35 = vector.broadcast %cst_17 : f32 to vector<8x1xf32>
    %c0_i32 = arith.constant 0 : i32
    %36 = vector.broadcast %c0_i32 : i32 to vector<8x128xi32>
    %37 = arith.cmpi slt, %32, %36 : vector<8x128xi32>
    %c0_i32_18 = arith.constant 0 : i32
    %38 = vector.broadcast %c0_i32_18 : i32 to vector<8x128xi32>
    %39 = arith.cmpi sge, %32, %38 : vector<8x128xi32>
    %c10_i32 = arith.constant 10 : i32
    %40 = vector.broadcast %c10_i32 : i32 to vector<8x128xi32>
    %41 = arith.cmpi slt, %32, %40 : vector<8x128xi32>
    %42 = arith.andi %39, %41 : vector<8x128xi1>
    %cst_19 = arith.constant -1.000000e+30 : f32
    %43 = vector.broadcast %cst_19 : f32 to vector<8x128xf32>
    %44 = arith.select %42, %31, %43 : vector<8x128xi1>, vector<8x128xf32>
    %cst_20 = arith.constant dense<0xFF800000> : vector<8xf32>
    %45 = vector.multi_reduction <maximumf>, %44, %cst_20 [1] : vector<8x128xf32> to vector<8xf32>
    %46 = vector.shape_cast %45 : vector<8xf32> to vector<8x1xf32>
    %47 = vector.shape_cast %46 : vector<8x1xf32> to vector<8x1xf32>
    %48 = vector.broadcast %47 : vector<8x1xf32> to vector<8x128xf32>
    %49 = arith.select %42, %48, %34 : vector<8x128xi1>, vector<8x128xf32>
    %50 = arith.addf %35, %46 : vector<8x1xf32>
    %51 = vector.extract_strided_slice %33 {offsets = [0, 0], sizes = [8, 1], strides = [1, 1]} : vector<8x5xi32> to vector<8x1xi32>
    %c0_i32_21 = arith.constant 0 : i32
    %52 = vector.broadcast %c0_i32_21 : i32 to vector<8x1xi32>
    %53 = arith.addi %51, %52 : vector<8x1xi32>
    %54 = vector.broadcast %53 : vector<8x1xi32> to vector<8x128xi32>
    %55 = arith.cmpi eq, %32, %54 : vector<8x128xi32>
    %56 = arith.ori %37, %55 : vector<8x128xi1>
    %c10_i32_22 = arith.constant 10 : i32
    %57 = vector.broadcast %c10_i32_22 : i32 to vector<8x128xi32>
    %58 = arith.cmpi sge, %32, %57 : vector<8x128xi32>
    %c20_i32 = arith.constant 20 : i32
    %59 = vector.broadcast %c20_i32 : i32 to vector<8x128xi32>
    %60 = arith.cmpi slt, %32, %59 : vector<8x128xi32>
    %61 = arith.andi %58, %60 : vector<8x128xi1>
    %cst_23 = arith.constant -1.000000e+30 : f32
    %62 = vector.broadcast %cst_23 : f32 to vector<8x128xf32>
    %63 = arith.select %61, %31, %62 : vector<8x128xi1>, vector<8x128xf32>
    %cst_24 = arith.constant dense<0xFF800000> : vector<8xf32>
    %64 = vector.multi_reduction <maximumf>, %63, %cst_24 [1] : vector<8x128xf32> to vector<8xf32>
    %65 = vector.shape_cast %64 : vector<8xf32> to vector<8x1xf32>
    %66 = vector.shape_cast %65 : vector<8x1xf32> to vector<8x1xf32>
    %67 = vector.broadcast %66 : vector<8x1xf32> to vector<8x128xf32>
    %68 = arith.select %61, %67, %49 : vector<8x128xi1>, vector<8x128xf32>
    %69 = arith.addf %50, %65 : vector<8x1xf32>
    %70 = vector.extract_strided_slice %33 {offsets = [0, 1], sizes = [8, 1], strides = [1, 1]} : vector<8x5xi32> to vector<8x1xi32>
    %c10_i32_25 = arith.constant 10 : i32
    %71 = vector.broadcast %c10_i32_25 : i32 to vector<8x1xi32>
    %72 = arith.addi %70, %71 : vector<8x1xi32>
    %73 = vector.broadcast %72 : vector<8x1xi32> to vector<8x128xi32>
    %74 = arith.cmpi eq, %32, %73 : vector<8x128xi32>
    %75 = arith.ori %56, %74 : vector<8x128xi1>
    %c20_i32_26 = arith.constant 20 : i32
    %76 = vector.broadcast %c20_i32_26 : i32 to vector<8x128xi32>
    %77 = arith.cmpi sge, %32, %76 : vector<8x128xi32>
    %c30_i32 = arith.constant 30 : i32
    %78 = vector.broadcast %c30_i32 : i32 to vector<8x128xi32>
    %79 = arith.cmpi slt, %32, %78 : vector<8x128xi32>
    %80 = arith.andi %77, %79 : vector<8x128xi1>
    %cst_27 = arith.constant -1.000000e+30 : f32
    %81 = vector.broadcast %cst_27 : f32 to vector<8x128xf32>
    %82 = arith.select %80, %31, %81 : vector<8x128xi1>, vector<8x128xf32>
    %cst_28 = arith.constant dense<0xFF800000> : vector<8xf32>
    %83 = vector.multi_reduction <maximumf>, %82, %cst_28 [1] : vector<8x128xf32> to vector<8xf32>
    %84 = vector.shape_cast %83 : vector<8xf32> to vector<8x1xf32>
    %85 = vector.shape_cast %84 : vector<8x1xf32> to vector<8x1xf32>
    %86 = vector.broadcast %85 : vector<8x1xf32> to vector<8x128xf32>
    %87 = arith.select %80, %86, %68 : vector<8x128xi1>, vector<8x128xf32>
    %88 = arith.addf %69, %84 : vector<8x1xf32>
    %89 = vector.extract_strided_slice %33 {offsets = [0, 2], sizes = [8, 1], strides = [1, 1]} : vector<8x5xi32> to vector<8x1xi32>
    %c20_i32_29 = arith.constant 20 : i32
    %90 = vector.broadcast %c20_i32_29 : i32 to vector<8x1xi32>
    %91 = arith.addi %89, %90 : vector<8x1xi32>
    %92 = vector.broadcast %91 : vector<8x1xi32> to vector<8x128xi32>
    %93 = arith.cmpi eq, %32, %92 : vector<8x128xi32>
    %94 = arith.ori %75, %93 : vector<8x128xi1>
    %c30_i32_30 = arith.constant 30 : i32
    %95 = vector.broadcast %c30_i32_30 : i32 to vector<8x128xi32>
    %96 = arith.cmpi sge, %32, %95 : vector<8x128xi32>
    %c40_i32 = arith.constant 40 : i32
    %97 = vector.broadcast %c40_i32 : i32 to vector<8x128xi32>
    %98 = arith.cmpi slt, %32, %97 : vector<8x128xi32>
    %99 = arith.andi %96, %98 : vector<8x128xi1>
    %cst_31 = arith.constant -1.000000e+30 : f32
    %100 = vector.broadcast %cst_31 : f32 to vector<8x128xf32>
    %101 = arith.select %99, %31, %100 : vector<8x128xi1>, vector<8x128xf32>
    %cst_32 = arith.constant dense<0xFF800000> : vector<8xf32>
    %102 = vector.multi_reduction <maximumf>, %101, %cst_32 [1] : vector<8x128xf32> to vector<8xf32>
    %103 = vector.shape_cast %102 : vector<8xf32> to vector<8x1xf32>
    %104 = vector.shape_cast %103 : vector<8x1xf32> to vector<8x1xf32>
    %105 = vector.broadcast %104 : vector<8x1xf32> to vector<8x128xf32>
    %106 = arith.select %99, %105, %87 : vector<8x128xi1>, vector<8x128xf32>
    %107 = arith.addf %88, %103 : vector<8x1xf32>
    %108 = vector.extract_strided_slice %33 {offsets = [0, 3], sizes = [8, 1], strides = [1, 1]} : vector<8x5xi32> to vector<8x1xi32>
    %c30_i32_33 = arith.constant 30 : i32
    %109 = vector.broadcast %c30_i32_33 : i32 to vector<8x1xi32>
    %110 = arith.addi %108, %109 : vector<8x1xi32>
    %111 = vector.broadcast %110 : vector<8x1xi32> to vector<8x128xi32>
    %112 = arith.cmpi eq, %32, %111 : vector<8x128xi32>
    %113 = arith.ori %94, %112 : vector<8x128xi1>
    %c40_i32_34 = arith.constant 40 : i32
    %114 = vector.broadcast %c40_i32_34 : i32 to vector<8x128xi32>
    %115 = arith.cmpi sge, %32, %114 : vector<8x128xi32>
    %c50_i32 = arith.constant 50 : i32
    %116 = vector.broadcast %c50_i32 : i32 to vector<8x128xi32>
    %117 = arith.cmpi slt, %32, %116 : vector<8x128xi32>
    %118 = arith.andi %115, %117 : vector<8x128xi1>
    %cst_35 = arith.constant -1.000000e+30 : f32
    %119 = vector.broadcast %cst_35 : f32 to vector<8x128xf32>
    %120 = arith.select %118, %31, %119 : vector<8x128xi1>, vector<8x128xf32>
    %cst_36 = arith.constant dense<0xFF800000> : vector<8xf32>
    %121 = vector.multi_reduction <maximumf>, %120, %cst_36 [1] : vector<8x128xf32> to vector<8xf32>
    %122 = vector.shape_cast %121 : vector<8xf32> to vector<8x1xf32>
    %123 = vector.shape_cast %122 : vector<8x1xf32> to vector<8x1xf32>
    %124 = vector.broadcast %123 : vector<8x1xf32> to vector<8x128xf32>
    %125 = arith.select %118, %124, %106 : vector<8x128xi1>, vector<8x128xf32>
    %126 = arith.addf %107, %122 : vector<8x1xf32>
    %127 = vector.extract_strided_slice %33 {offsets = [0, 4], sizes = [8, 1], strides = [1, 1]} : vector<8x5xi32> to vector<8x1xi32>
    %c40_i32_37 = arith.constant 40 : i32
    %128 = vector.broadcast %c40_i32_37 : i32 to vector<8x1xi32>
    %129 = arith.addi %127, %128 : vector<8x1xi32>
    %130 = vector.broadcast %129 : vector<8x1xi32> to vector<8x128xi32>
    %131 = arith.cmpi eq, %32, %130 : vector<8x128xi32>
    %132 = arith.ori %113, %131 : vector<8x128xi1>
    %c50_i32_38 = arith.constant 50 : i32
    %133 = vector.broadcast %c50_i32_38 : i32 to vector<8x128xi32>
    %134 = arith.cmpi slt, %32, %133 : vector<8x128xi32>
    %135 = arith.subf %31, %125 : vector<8x128xf32>
    %cst_39 = arith.constant -1.000000e+30 : f32
    %136 = vector.broadcast %cst_39 : f32 to vector<8x128xf32>
    %137 = arith.select %134, %135, %136 : vector<8x128xi1>, vector<8x128xf32>
    %138 = math.exp %137 : vector<8x128xf32>
    %cst_40 = arith.constant 0.000000e+00 : f32
    %139 = vector.broadcast %cst_40 : f32 to vector<8x1xf32>
    %c0_i32_41 = arith.constant 0 : i32
    %140 = vector.broadcast %c0_i32_41 : i32 to vector<8x128xi32>
    %141 = arith.cmpi sge, %32, %140 : vector<8x128xi32>
    %c10_i32_42 = arith.constant 10 : i32
    %142 = vector.broadcast %c10_i32_42 : i32 to vector<8x128xi32>
    %143 = arith.cmpi slt, %32, %142 : vector<8x128xi32>
    %144 = arith.andi %141, %143 : vector<8x128xi1>
    %cst_43 = arith.constant 0.000000e+00 : f32
    %145 = vector.broadcast %cst_43 : f32 to vector<8x128xf32>
    %146 = arith.select %144, %138, %145 : vector<8x128xi1>, vector<8x128xf32>
    %cst_44 = arith.constant dense<0.000000e+00> : vector<8xf32>
    %147 = vector.multi_reduction <add>, %146, %cst_44 [1] : vector<8x128xf32> to vector<8xf32>
    %148 = vector.shape_cast %147 : vector<8xf32> to vector<8x1xf32>
    %149 = math.log %148 : vector<8x1xf32>
    %150 = arith.addf %139, %149 : vector<8x1xf32>
    %c10_i32_45 = arith.constant 10 : i32
    %151 = vector.broadcast %c10_i32_45 : i32 to vector<8x128xi32>
    %152 = arith.cmpi sge, %32, %151 : vector<8x128xi32>
    %c20_i32_46 = arith.constant 20 : i32
    %153 = vector.broadcast %c20_i32_46 : i32 to vector<8x128xi32>
    %154 = arith.cmpi slt, %32, %153 : vector<8x128xi32>
    %155 = arith.andi %152, %154 : vector<8x128xi1>
    %cst_47 = arith.constant 0.000000e+00 : f32
    %156 = vector.broadcast %cst_47 : f32 to vector<8x128xf32>
    %157 = arith.select %155, %138, %156 : vector<8x128xi1>, vector<8x128xf32>
    %cst_48 = arith.constant dense<0.000000e+00> : vector<8xf32>
    %158 = vector.multi_reduction <add>, %157, %cst_48 [1] : vector<8x128xf32> to vector<8xf32>
    %159 = vector.shape_cast %158 : vector<8xf32> to vector<8x1xf32>
    %160 = math.log %159 : vector<8x1xf32>
    %161 = arith.addf %150, %160 : vector<8x1xf32>
    %c20_i32_49 = arith.constant 20 : i32
    %162 = vector.broadcast %c20_i32_49 : i32 to vector<8x128xi32>
    %163 = arith.cmpi sge, %32, %162 : vector<8x128xi32>
    %c30_i32_50 = arith.constant 30 : i32
    %164 = vector.broadcast %c30_i32_50 : i32 to vector<8x128xi32>
    %165 = arith.cmpi slt, %32, %164 : vector<8x128xi32>
    %166 = arith.andi %163, %165 : vector<8x128xi1>
    %cst_51 = arith.constant 0.000000e+00 : f32
    %167 = vector.broadcast %cst_51 : f32 to vector<8x128xf32>
    %168 = arith.select %166, %138, %167 : vector<8x128xi1>, vector<8x128xf32>
    %cst_52 = arith.constant dense<0.000000e+00> : vector<8xf32>
    %169 = vector.multi_reduction <add>, %168, %cst_52 [1] : vector<8x128xf32> to vector<8xf32>
    %170 = vector.shape_cast %169 : vector<8xf32> to vector<8x1xf32>
    %171 = math.log %170 : vector<8x1xf32>
    %172 = arith.addf %161, %171 : vector<8x1xf32>
    %c30_i32_53 = arith.constant 30 : i32
    %173 = vector.broadcast %c30_i32_53 : i32 to vector<8x128xi32>
    %174 = arith.cmpi sge, %32, %173 : vector<8x128xi32>
    %c40_i32_54 = arith.constant 40 : i32
    %175 = vector.broadcast %c40_i32_54 : i32 to vector<8x128xi32>
    %176 = arith.cmpi slt, %32, %175 : vector<8x128xi32>
    %177 = arith.andi %174, %176 : vector<8x128xi1>
    %cst_55 = arith.constant 0.000000e+00 : f32
    %178 = vector.broadcast %cst_55 : f32 to vector<8x128xf32>
    %179 = arith.select %177, %138, %178 : vector<8x128xi1>, vector<8x128xf32>
    %cst_56 = arith.constant dense<0.000000e+00> : vector<8xf32>
    %180 = vector.multi_reduction <add>, %179, %cst_56 [1] : vector<8x128xf32> to vector<8xf32>
    %181 = vector.shape_cast %180 : vector<8xf32> to vector<8x1xf32>
    %182 = math.log %181 : vector<8x1xf32>
    %183 = arith.addf %172, %182 : vector<8x1xf32>
    %c40_i32_57 = arith.constant 40 : i32
    %184 = vector.broadcast %c40_i32_57 : i32 to vector<8x128xi32>
    %185 = arith.cmpi sge, %32, %184 : vector<8x128xi32>
    %c50_i32_58 = arith.constant 50 : i32
    %186 = vector.broadcast %c50_i32_58 : i32 to vector<8x128xi32>
    %187 = arith.cmpi slt, %32, %186 : vector<8x128xi32>
    %188 = arith.andi %185, %187 : vector<8x128xi1>
    %cst_59 = arith.constant 0.000000e+00 : f32
    %189 = vector.broadcast %cst_59 : f32 to vector<8x128xf32>
    %190 = arith.select %188, %138, %189 : vector<8x128xi1>, vector<8x128xf32>
    %cst_60 = arith.constant dense<0.000000e+00> : vector<8xf32>
    %191 = vector.multi_reduction <add>, %190, %cst_60 [1] : vector<8x128xf32> to vector<8xf32>
    %192 = vector.shape_cast %191 : vector<8xf32> to vector<8x1xf32>
    %193 = math.log %192 : vector<8x1xf32>
    %194 = arith.addf %183, %193 : vector<8x1xf32>
    %cst_61 = arith.constant 0.000000e+00 : f32
    %195 = vector.broadcast %cst_61 : f32 to vector<8x128xf32>
    %196 = arith.select %132, %31, %195 : vector<8x128xi1>, vector<8x128xf32>
    %cst_62 = arith.constant dense<0.000000e+00> : vector<8xf32>
    %197 = vector.multi_reduction <add>, %196, %cst_62 [1] : vector<8x128xf32> to vector<8xf32>
    %198 = vector.shape_cast %197 : vector<8xf32> to vector<8x1xf32>
    %199 = arith.addf %194, %126 : vector<8x1xf32>
    %200 = arith.subf %199, %198 : vector<8x1xf32>
    %cst_63 = arith.constant 0.000000e+00 : f32
    %201 = vector.broadcast %cst_63 : f32 to vector<8x1xf32>
    %202 = arith.select %5, %200, %201 : vector<8x1xi1>, vector<8x1xf32>
    %cst_64 = arith.constant dense<0.000000e+00> : vector<1xf32>
    %203 = vector.multi_reduction <add>, %202, %cst_64 [0] : vector<8x1xf32> to vector<1xf32>
    %204 = vector.shape_cast %203 : vector<1xf32> to vector<1x1xf32>
    %205 = tpu.iota {dimensions = array<i32: 1>} : vector<1x128xi32>
    %c0_i32_65 = arith.constant 0 : i32
    %206 = vector.broadcast %c0_i32_65 : i32 to vector<1x128xi32>
    %207 = arith.cmpi eq, %205, %206 : vector<1x128xi32>
    %c1_i32 = arith.constant 1 : i32
    %208 = vector.broadcast %c1_i32 : i32 to vector<1x128xi32>
    %209 = arith.cmpi eq, %205, %208 : vector<1x128xi32>
    %cst_66 = arith.constant 0.000000e+00 : f32
    %210 = vector.shape_cast %204 : vector<1x1xf32> to vector<1x1xf32>
    %211 = vector.broadcast %210 : vector<1x1xf32> to vector<1x128xf32>
    %212 = vector.broadcast %cst_66 : f32 to vector<1x128xf32>
    %213 = arith.select %209, %211, %212 : vector<1x128xi1>, vector<1x128xf32>
    %214 = vector.shape_cast %28 : vector<1x1xf32> to vector<1x1xf32>
    %215 = vector.broadcast %214 : vector<1x1xf32> to vector<1x128xf32>
    %216 = arith.select %207, %215, %213 : vector<1x128xi1>, vector<1x128xf32>
    %217 = vector.shape_cast %216 : vector<1x128xf32> to vector<1x1x128xf32>
    %c0_67 = arith.constant 0 : index
    %c0_68 = arith.constant 0 : index
    %c0_69 = arith.constant 0 : index
    %218 = vector.load %arg6[%c0_67, %c0_68, %c0_69] : memref<1x1x128xf32, #tpu.memory_space<vmem>>, vector<1x1x128xf32>
    tpu.vector_store %arg6[%c0_67, %c0_68, %c0_69], %217 {strides = array<i32>} : memref<1x1x128xf32, #tpu.memory_space<vmem>>, vector<1x1x128xf32>,
    return
  }
  func.func @transform_0(%arg0: i32) -> (i32, i32) {
    %c0_i32 = arith.constant 0 : i32
    %c0_i32_0 = arith.constant 0 : i32
    return %arg0, %c0_i32 : i32, i32
  }
  func.func @transform_1(%arg0: i32) -> (i32, i32) {
    %c0_i32 = arith.constant 0 : i32
    %c0_i32_0 = arith.constant 0 : i32
    return %arg0, %c0_i32 : i32, i32
  }
  func.func @transform_2(%arg0: i32) -> (i32, i32) {
    %c0_i32 = arith.constant 0 : i32
    %c0_i32_0 = arith.constant 0 : i32
    return %arg0, %c0_i32 : i32, i32
  }
  func.func @transform_3(%arg0: i32) -> (i32, i32) {
    %c0_i32 = arith.constant 0 : i32
    %c0_i32_0 = arith.constant 0 : i32
    %c0_i32_1 = arith.constant 0 : i32
    return %c0_i32, %c0_i32_0 : i32, i32
  }
  func.func @transform_4(%arg0: i32) -> (i32, i32) {
    %c0_i32 = arith.constant 0 : i32
    %c0_i32_0 = arith.constant 0 : i32
    return %arg0, %c0_i32 : i32, i32
  }
  func.func @transform_5(%arg0: i32) -> (i32, i32, i32) {
    %c0_i32 = arith.constant 0 : i32
    %c0_i32_0 = arith.constant 0 : i32
    %c0_i32_1 = arith.constant 0 : i32
    return %arg0, %c0_i32, %c0_i32_0 : i32, i32, i32
  }
}

</mosaic_0001>

<llo_original>
// kernel: dib_loss_forward.1
$region0: #{dib_loss_forward.1}
  #allocation0 [shape = 'u32[]', space=smem, size = 0x4, offset = 0x4, fixed_abs, tag = 'smem constant byte address 0x4 - core index']
  #allocation1 [shape = 'u32[144,128]{1,0:T(1,128)}', space=vmem, size = 0x12000, scoped, tag = 'internal scratch']
  %s0 = inlined_call_operand.vmem [shape: f32[8,128], index: 0, kind: input, shape index: {}]
  %s1 = inlined_call_operand.vmem [shape: s32[8,1], index: 1, kind: input, shape index: {}]
  %s2 = inlined_call_operand.vmem [shape: f32[8,40], index: 2, kind: input, shape index: {}]
  %s3 = inlined_call_operand.vmem [shape: f32[40,128], index: 3, kind: input, shape index: {}]
  %s4 = inlined_call_operand.vmem [shape: s32[8,5], index: 4, kind: input, shape index: {}]
  %s5 = inlined_call_operand.vmem [shape: f32[1,1,128], index: 5, kind: output, shape index: {}]
  %s6 = sld [smem:[#allocation0]]
  $region30: #{dib_loss_forward.1} parent=0
    _
  %s8 = ssub.s32 1, %s6
  %s9 = scalar_select 0, %s8, %s6
  // Predicated region
  $region2: #{dib_loss_forward.1} parent=0 // pred_check
    _
  $region3: #{dib_loss_forward.1} parent=0 // pred_check_branch
    %11 = sbr.rel (0) target = $region5
  $region4: #{dib_loss_forward.1} parent=0 // pred_region
    _
  $region5: #{dib_loss_forward.1} parent=0 // pred_fallthru
    _
  // Predicated region
  $region6: #{dib_loss_forward.1} parent=0 // pred_check
    _
  $region7: #{dib_loss_forward.1} parent=0 // pred_check_branch
    %13 = sbr.rel (0) target = $region9
  $region8: #{dib_loss_forward.1} parent=0 // pred_region
    _
  $region9: #{dib_loss_forward.1} parent=0 // pred_fallthru
    _
  // Predicated region
  $region10: #{dib_loss_forward.1} parent=0 // pred_check
    _
  $region11: #{dib_loss_forward.1} parent=0 // pred_check_branch
    %15 = sbr.rel (0) target = $region13
  $region12: #{dib_loss_forward.1} parent=0 // pred_region
    _
  $region13: #{dib_loss_forward.1} parent=0 // pred_fallthru
    _
  // Predicated region
  $region14: #{dib_loss_forward.1} parent=0 // pred_check
    _
  $region15: #{dib_loss_forward.1} parent=0 // pred_check_branch
    %17 = sbr.rel (0) target = $region17
  $region16: #{dib_loss_forward.1} parent=0 // pred_region
    _
  $region17: #{dib_loss_forward.1} parent=0 // pred_fallthru
    _
  // Predicated region
  $region18: #{dib_loss_forward.1} parent=0 // pred_check
    _
  $region19: #{dib_loss_forward.1} parent=0 // pred_check_branch
    %19 = sbr.rel (0) target = $region21
  $region20: #{dib_loss_forward.1} parent=0 // pred_region
    _
  $region21: #{dib_loss_forward.1} parent=0 // pred_fallthru
    _
  %v20 = vlaneseq
  %v21 = vshrl.u32 %v20, 7
  %s22 = smul.u32 0, 8
  %v23 = vstv %s22
  %v24 = vadd.s32 %v21, %v23
  %vm25 = vcmp.lt.s32.totalorder %v24, 8
  %v26 = vld [vmem:[%s0] sm:$0xff]
  %v27 = vld [vmem:[%s1] sm:$0xff]
  %v28 = vlaneseq
  %v29 = vand.u32 %v28, 127
  %30 = vmax.xlane.f32.xlu0 %v26
  %v31 = vpop.xlane.xlu0 %30
  %v32 = vsub.f32 %v26, %v31
  %v33 = vmul.f32 %v32, 1.442695
  %v34 = vpow.pop %v33
  %35 = vadd.xlane.f32.xlu0 %v34
  %v36 = vpop.xlane.xlu0 %35
  %v37 = vlog2.pop %v36
  %v38 = vmul.f32 %v37, 0.6931472
  %v39 = vadd.f32 %v38, %v31
  %40 = vset.pattern.permute.xlu0 0
  %41 = vperm.xlu0 %40, %v27
  %v42 = vpop.permute.xlu0 %41
  %vm43 = vcmp.eq.s32.totalorder %v29, %v42
  %v44 = vsel %vm43, %v26, 0.0
  %45 = vadd.xlane.f32.xlu0 %v44
  %v46 = vpop.xlane.xlu0 %45
  %v47 = vsub.f32 %v39, %v46
  %v48 = vsel %vm25, %v47, 0.0
  %v49 = vrot.slane %v48, 4
  %v50 = vadd.f32 %v48, %v49
  %v51 = vrot.slane %v50, 2
  %v52 = vadd.f32 %v50, %v51
  %v53 = vrot.slane %v52, 1
  %v54 = vadd.f32 %v52, %v53
  %v55 = vld [vmem:[%s2] sm:$0xff]
  %v56 = vld [vmem:[%s3] sm:$0xff]
  %v57 = vld [vmem:[%s3 + $0x8] sm:$0xff]
  %v58 = vld [vmem:[%s3 + $0x10] sm:$0xff]
  %v59 = vld [vmem:[%s3 + $0x18] sm:$0xff]
  %v60 = vld [vmem:[%s3 + $0x20] sm:$0xff]
  %vm61 = vcmask 326656
  %v63 = vsel %vm61, %v55, 0
  %65 = vmatprep.subr.mxu0 0.0
  %66 = vmatpush1.msra.mxu0 %v56
  %67 = vmatprep.subr.mxu0 0.0
  %68 = vmatpush1.msra.mxu0 %v57
  %69 = vmatprep.subr.mxu0 0.0
  %70 = vmatpush1.msra.mxu0 %v58
  %71 = vmatprep.subr.mxu0 0.0
  %72 = vmatpush1.msra.mxu0 %v59
  %73 = vmatprep.subr.mxu0 0.0
  %74 = vmatpush1.msra.mxu0 %v60
  %75 = vmatprep.subr.mxu0 0.0
  %76 = vmatpush1.msra.mxu0 0.0
  %77 = vmatprep.subr.mxu0 0.0
  %78 = vmatpush1.msra.mxu0 0.0
  %79 = vmatprep.subr.mxu0 0.0
  %80 = vmatpush1.msra.mxu0 0.0
  %81 = vmatprep.subr.mxu0 0.0
  %82 = vmatpush1.msra.mxu0 0.0
  %83 = vmatprep.subr.mxu0 0.0
  %84 = vmatpush1.msra.mxu0 0.0
  %85 = vmatprep.subr.mxu0 0.0
  %86 = vmatpush1.msra.mxu0 0.0
  %87 = vmatprep.subr.mxu0 0.0
  %88 = vmatpush1.msra.mxu0 0.0
  %89 = vmatprep.subr.mxu0 0.0
  %90 = vmatpush1.msra.mxu0 0.0
  %91 = vmatprep.subr.mxu0 0.0
  %92 = vmatpush1.msra.mxu0 0.0
  %93 = vmatprep.subr.mxu0 0.0
  %94 = vmatpush1.msra.mxu0 0.0
  %95 = vmatprep.subr.mxu0 0.0
  %96 = vmatpush1.msra.mxu0 0.0
  %97 = vmatprep.subr.mxu0 0.0
  %98 = vmatpush1.msra.mxu0 0.0
  %99 = vmatprep.subr.mxu0 0.0
  %100 = vmatpush1.msra.mxu0 0.0
  %101 = vmatprep.subr.mxu0 0.0
  %102 = vmatpush1.msra.mxu0 0.0
  %103 = vmatprep.subr.mxu0 0.0
  %104 = vmatpush1.msra.mxu0 0.0
  %105 = vmatprep.subr.mxu0 0.0
  %106 = vmatpush1.msra.mxu0 0.0
  %107 = vmatprep.subr.mxu0 0.0
  %108 = vmatpush1.msra.mxu0 0.0
  %109 = vmatprep.subr.mxu0 0.0
  %110 = vmatpush1.msra.mxu0 0.0
  %111 = vmatprep.subr.mxu0 0.0
  %112 = vmatpush1.msra.mxu0 0.0
  %113 = vmatprep.subr.mxu0 0.0
  %114 = vmatpush1.msra.mxu0 0.0
  %115 = vmatprep.subr.mxu0 0.0
  %116 = vmatpush1.msra.mxu0 0.0
  %117 = vmatprep.subr.mxu0 0.0
  %118 = vmatpush1.msra.mxu0 0.0
  %119 = vmatprep.subr.mxu0 0.0
  %120 = vmatpush1.msra.mxu0 0.0
  %121 = vmatprep.subr.mxu0 0.0
  %122 = vmatpush1.msra.mxu0 0.0
  %123 = vmatprep.subr.mxu0 0.0
  %124 = vmatpush1.msra.mxu0 0.0
  %125 = vmatprep.subr.mxu0 0.0
  %126 = vmatpush1.msra.mxu0 0.0
  %127 = vmatprep.subr.mxu0 0.0
  %128 = vmatpush1.msra.mxu0 0.0
  %129 = vmatprep.mubr.f32.mxu0 0.0
  %130 = vmatmul.mubr.f32.gmra.mrb[0].mxu0 %v63
  %v131 = vpop.f32.mrb[0].mxu0
  %v132 = vadd.f32 0.0, %v131
  %v133 = vpop.f32.mrb[0].mxu0
  %134 = vdwg.mxu0
  %v135 = vld [vmem:[%s4] sm:$0xff]
  %vm136 = vcmp.lt.s32.totalorder %v29, 0
  %vm137 = vcmp.ge.s32.totalorder %v29, 0
  %vm138 = vcmp.lt.s32.totalorder %v29, 10
  %vm139 = vmand %vm137, %vm138
  %v140 = vsel %vm139, %v132, -1e+30
  %141 = vmax.xlane.f32.xlu0 %v140
  %v142 = vpop.xlane.xlu0 %141
  %v143 = vsel %vm139, %v142, 0.0
  %v144 = vadd.f32 %v142, 0.0
  %145 = vset.pattern.permute.xlu0 0
  %146 = vperm.xlu0 %145, %v135
  %v147 = vpop.permute.xlu0 %146
  %vm148 = vcmp.eq.s32.totalorder %v29, %v147
  %vm149 = vmor %vm136, %vm148
  %vm150 = vcmp.ge.s32.totalorder %v29, 10
  %vm151 = vcmp.lt.s32.totalorder %v29, 20
  %vm152 = vmand %vm150, %vm151
  %v153 = vsel %vm152, %v132, -1e+30
  %154 = vmax.xlane.f32.xlu0 %v153
  %v155 = vpop.xlane.xlu0 %154
  %v156 = vsel %vm152, %v155, %v143
  %v157 = vadd.f32 %v144, %v155
  %v158 = vadd.s32 %v135, 10
  %159 = vset.pattern.permute.xlu0 1
  %160 = vperm.xlu0 %159, %v158
  %v161 = vpop.permute.xlu0 %160
  %vm162 = vcmp.eq.s32.totalorder %v29, %v161
  %vm163 = vmor %vm149, %vm162
  %vm164 = vcmp.ge.s32.totalorder %v29, 20
  %vm165 = vcmp.lt.s32.totalorder %v29, 30
  %vm166 = vmand %vm164, %vm165
  %v167 = vsel %vm166, %v132, -1e+30
  %168 = vmax.xlane.f32.xlu0 %v167
  %v169 = vpop.xlane.xlu0 %168
  %v170 = vsel %vm166, %v169, %v156
  %v171 = vadd.f32 %v157, %v169
  %v172 = vadd.s32 %v135, 20
  %173 = vset.pattern.permute.xlu0 2
  %174 = vperm.xlu0 %173, %v172
  %v175 = vpop.permute.xlu0 %174
  %vm176 = vcmp.eq.s32.totalorder %v29, %v175
  %vm177 = vmor %vm163, %vm176
  %vm178 = vcmp.ge.s32.totalorder %v29, 30
  %vm179 = vcmp.lt.s32.totalorder %v29, 40
  %vm180 = vmand %vm178, %vm179
  %v181 = vsel %vm180, %v132, -1e+30
  %182 = vmax.xlane.f32.xlu0 %v181
  %v183 = vpop.xlane.xlu0 %182
  %v184 = vsel %vm180, %v183, %v170
  %v185 = vadd.f32 %v171, %v183
  %v186 = vadd.s32 %v135, 30
  %187 = vset.pattern.permute.xlu0 3
  %188 = vperm.xlu0 %187, %v186
  %v189 = vpop.permute.xlu0 %188
  %vm190 = vcmp.eq.s32.totalorder %v29, %v189
  %vm191 = vmor %vm177, %vm190
  %vm192 = vcmp.ge.s32.totalorder %v29, 40
  %vm193 = vcmp.lt.s32.totalorder %v29, 50
  %vm194 = vmand %vm192, %vm193
  %v195 = vsel %vm194, %v132, -1e+30
  %196 = vmax.xlane.f32.xlu0 %v195
  %v197 = vpop.xlane.xlu0 %196
  %v198 = vsel %vm194, %v197, %v184
  %v199 = vadd.f32 %v185, %v197
  %v200 = vadd.s32 %v135, 40
  %201 = vset.pattern.permute.xlu0 4
  %202 = vperm.xlu0 %201, %v200
  %v203 = vpop.permute.xlu0 %202
  %vm204 = vcmp.eq.s32.totalorder %v29, %v203
  %vm205 = vmor %vm191, %vm204
  %v206 = vsub.f32 %v132, %v198
  %v207 = vsel %vm193, %v206, -1e+30
  %v208 = vmul.f32 %v207, 1.442695
  %v209 = vpow.pop %v208
  %v210 = vsel %vm139, %v209, 0.0
  %211 = vadd.xlane.f32.xlu0 %v210
  %v212 = vpop.xlane.xlu0 %211
  %v213 = vlog2.pop %v212
  %v214 = vmul.f32 %v213, 0.6931472
  %v215 = vadd.f32 %v214, 0.0
  %v216 = vsel %vm152, %v209, 0.0
  %217 = vadd.xlane.f32.xlu0 %v216
  %v218 = vpop.xlane.xlu0 %217
  %v219 = vlog2.pop %v218
  %v220 = vmul.f32 %v219, 0.6931472
  %v221 = vadd.f32 %v215, %v220
  %v222 = vsel %vm166, %v209, 0.0
  %223 = vadd.xlane.f32.xlu0 %v222
  %v224 = vpop.xlane.xlu0 %223
  %v225 = vlog2.pop %v224
  %v226 = vmul.f32 %v225, 0.6931472
  %v227 = vadd.f32 %v221, %v226
  %v228 = vsel %vm180, %v209, 0.0
  %229 = vadd.xlane.f32.xlu0 %v228
  %v230 = vpop.xlane.xlu0 %229
  %v231 = vlog2.pop %v230
  %v232 = vmul.f32 %v231, 0.6931472
  %v233 = vadd.f32 %v227, %v232
  %v234 = vsel %vm194, %v209, 0.0
  %235 = vadd.xlane.f32.xlu0 %v234
  %v236 = vpop.xlane.xlu0 %235
  %v237 = vlog2.pop %v236
  %v238 = vmul.f32 %v237, 0.6931472
  %v239 = vadd.f32 %v233, %v238
  %v240 = vsel %vm205, %v132, 0.0
  %241 = vadd.xlane.f32.xlu0 %v240
  %v242 = vpop.xlane.xlu0 %241
  %v243 = vadd.f32 %v239, %v199
  %v244 = vsub.f32 %v243, %v242
  %v245 = vsel %vm25, %v244, 0.0
  %v246 = vrot.slane %v245, 4
  %v247 = vadd.f32 %v245, %v246
  %v248 = vrot.slane %v247, 2
  %v249 = vadd.f32 %v247, %v248
  %v250 = vrot.slane %v249, 1
  %v251 = vadd.f32 %v249, %v250
  %vm252 = vcmp.eq.s32.totalorder %v29, 0
  %vm253 = vcmp.eq.s32.totalorder %v29, 1
  %v254 = vsel %vm253, %v251, 0.0
  %v255 = vsel %vm252, %v54, %v254
  %256 = vst [vmem:[%s5] sm:$0x1] %v255
  // Predicated region
  $region22: #{dib_loss_forward.1} parent=0 // pred_check
    _
  $region23: #{dib_loss_forward.1} parent=0 // pred_check_branch
    %258 = sbr.rel (0) target = $region25
  $region24: #{dib_loss_forward.1} parent=0 // pred_region
    _
  $region25: #{dib_loss_forward.1} parent=0 // pred_fallthru
    _
  // Predicated region
  $region26: #{dib_loss_forward.1} parent=0 // pred_check
    _
  $region27: #{dib_loss_forward.1} parent=0 // pred_check_branch
    %260 = sbr.rel (0) target = $region29
  $region28: #{dib_loss_forward.1} parent=0 // pred_region
    _
  $region29: #{dib_loss_forward.1} parent=0 // pred_fallthru
    _

</llo_original>
